<compile_context>
chip_gen: v5e
topology: v5e:2x2
jax: 0.10.0
libtpu: 0.0.40
codegen_flags: <defaults>
</compile_context>

<pallas_src>
import functools

import jax
import jax.numpy as jnp
from jax import lax
from jax.experimental import pallas as pl
from jax.experimental.pallas import tpu as pltpu

IN_F, H1_F, H2_F, OUT_F = 10, 15, 28, 1

# dot_general dimension numbers for A @ B^T (contract last dim of both).
_TRANS_B_DIMS = (((1,), (1,)), ((), ()))


def _round_up(n, m):
    return ((n + m - 1) // m) * m


def _mlp_kernel(x_ref, w1_ref, b1_ref, w2_ref, b2_ref, w3_ref, b3_ref, oT_ref):
    """Fused forward with batch on the lane axis.

    x_ref  : (TB, 10)  one batch tile in native (row-major) layout
    w*_ref : PyTorch layout (out_features, in_features)
    b*_ref : (out_features, 1) column vectors (broadcast over lanes)
    oT_ref : (1, TB)   lane-dense output tile
    """
    x = x_ref[...].astype(jnp.float32)                                   # (TB, 10)

    # Layer 1: W1 @ x^T.  NT contraction -> transpose folded into MXU feed.
    h1 = lax.dot_general(w1_ref[...], x, _TRANS_B_DIMS,
                         preferred_element_type=jnp.float32)             # (15, TB)
    h1 = jnp.maximum(h1 + b1_ref[...], 0.0)

    h2 = jnp.dot(w2_ref[...], h1, preferred_element_type=jnp.float32)    # (28, TB)
    h2 = jnp.maximum(h2 + b2_ref[...], 0.0)

    logits = jnp.dot(w3_ref[...], h2, preferred_element_type=jnp.float32)
    logits = logits + b3_ref[...]                                        # (1, TB)

    oT_ref[...] = jax.nn.sigmoid(logits).astype(oT_ref.dtype)


@functools.partial(jax.jit, static_argnames=("tile_b",))
def svm_forward(x, w1, b1, w2, b2, w3, b3, *, tile_b=16384):
    """x: (B, 10).  Weights in PyTorch layout (out, in); biases (out, 1).

    Returns (B, 1) f32 = sigmoid(relu(relu(x@W1.T+b1)@W2.T+b2)@W3.T+b3).
    """
    batch = x.shape[0]

    # Batch tile: multiple of 128 (lane width), capped at tile_b.  Large
    # batches are split into >= 4 grid steps so v7x can shard them over its
    # 2 TensorCores; small batches collapse to a single step.
    tb = _round_up(max(pl.cdiv(batch, 4), 1), 128)
    tb = min(tile_b, tb)
    grid = (pl.cdiv(batch, tb),)          # ragged final block handled by Pallas

    # Advisory cost: the kernel is HBM-traffic / step-overhead bound.
    flops = 2 * batch * (IN_F * H1_F + H1_F * H2_F + H2_F * OUT_F)
    param_bytes = 4 * (H1_F * IN_F + H1_F + H2_F * H1_F + H2_F + OUT_F * H2_F + OUT_F)
    bytes_accessed = batch * (IN_F + OUT_F) * 4 + param_bytes

    outT = pl.pallas_call(
        _mlp_kernel,
        out_shape=jax.ShapeDtypeStruct((OUT_F, batch), jnp.float32),
        grid=grid,
        in_specs=[
            # x tile marches along the batch axis, double-buffered.
            pl.BlockSpec((tb, IN_F), lambda i: (i, 0)),
            # Weights / biases: constant index_map -> resident, not re-DMA'd.
            pl.BlockSpec((H1_F, IN_F), lambda i: (0, 0)),   # w1 (15, 10)
            pl.BlockSpec((H1_F, 1), lambda i: (0, 0)),      # b1 (15, 1)
            pl.BlockSpec((H2_F, H1_F), lambda i: (0, 0)),   # w2 (28, 15)
            pl.BlockSpec((H2_F, 1), lambda i: (0, 0)),      # b2 (28, 1)
            pl.BlockSpec((OUT_F, H2_F), lambda i: (0, 0)),  # w3 (1, 28)
            pl.BlockSpec((OUT_F, 1), lambda i: (0, 0)),     # b3 (1, 1)
        ],
        out_specs=pl.BlockSpec((OUT_F, tb), lambda i: (0, i)),
        compiler_params=pltpu.CompilerParams(
            dimension_semantics=("parallel",),      # v7x: shard batch tiles over 2 TCs
            vmem_limit_bytes=48 * 1024 * 1024,      # explicit budget (>= v5e's 16 MiB default)
        ),
        cost_estimate=pl.CostEstimate(
            flops=flops, transcendentals=batch, bytes_accessed=bytes_accessed),
    )(x, w1, b1, w2, b2, w3, b3)

    # (1, B) -> (B, 1): layout-identical degenerate transpose (free reshape).
    return outT.T


def init_params(key):
    """PyTorch nn.Linear-style init: uniform(+-1/sqrt(fan_in)).

    Weights stored in PyTorch layout (out_features, in_features);
    biases stored as (out_features, 1) columns.
    """
    dims = [(IN_F, H1_F), (H1_F, H2_F), (H2_F, OUT_F)]
    params = []
    for fan_in, fan_out in dims:
        key, kw, kb = jax.random.split(key, 3)
        bound = 1.0 / jnp.sqrt(fan_in)
        w = jax.random.uniform(kw, (fan_out, fan_in), jnp.float32, -bound, bound)
        b = jax.random.uniform(kb, (fan_out, 1), jnp.float32, -bound, bound)
        params += [w, b]
    return tuple(params)


def _reference(x, w1, b1, w2, b2, w3, b3):
    h1 = jnp.maximum(x @ w1.T + b1.T, 0.0)
    h2 = jnp.maximum(h1 @ w2.T + b2.T, 0.0)
    return jax.nn.sigmoid(h2 @ w3.T + b3.T)


if __name__ == "__main__":
    key = jax.random.PRNGKey(0)
    key, kx1, kx2 = jax.random.split(key, 3)
    w1, b1, w2, b2, w3, b3 = init_params(key)

    # Small demo batch (single grid step, ragged block: 8 rows inside a 128-row tile).
    x_small = jax.random.normal(kx1, (8, IN_F), jnp.float32)
    out_small = jax.block_until_ready(svm_forward(x_small, w1, b1, w2, b2, w3, b3))
    ref_small = _reference(x_small, w1, b1, w2, b2, w3, b3)
    assert out_small.shape == (8, 1)
    assert jnp.allclose(out_small, ref_small, atol=1e-5, rtol=1e-5)

    # Multi-step grid with a ragged final tile (2500 rows, tile 640 -> 4 steps).
    x_big = jax.random.normal(kx2, (2500, IN_F), jnp.float32)
    out_big = jax.block_until_ready(svm_forward(x_big, w1, b1, w2, b2, w3, b3))
    ref_big = _reference(x_big, w1, b1, w2, b2, w3, b3)
    assert out_big.shape == (2500, 1)
    assert jnp.allclose(out_big, ref_big, atol=1e-5, rtol=1e-5)

    print("KERNEL_OK")
</pallas_src>

<mosaic_0001>
module attributes {stable_mosaic.version = 11 : i64} {
  func.func @_mlp_kernel(%arg0: i32, %arg1: memref<128x10xf32, #tpu.memory_space<vmem>>, %arg2: memref<15x10xf32, #tpu.memory_space<vmem>>, %arg3: memref<15x1xf32, #tpu.memory_space<vmem>>, %arg4: memref<28x15xf32, #tpu.memory_space<vmem>>, %arg5: memref<28x1xf32, #tpu.memory_space<vmem>>, %arg6: memref<1x28xf32, #tpu.memory_space<vmem>>, %arg7: memref<1x1xf32, #tpu.memory_space<vmem>>, %arg8: memref<1x128xf32, #tpu.memory_space<vmem>>) attributes {dimension_semantics = [#tpu.dimension_semantics<parallel>], iteration_bounds = array<i64: 1>, scalar_prefetch = 0 : i64, scratch_operands = 0 : i64, tpu.core_type = #tpu.core_type<tc>, window_params = [{transform_indices = @transform_0, window_bounds = array<i64: 128, 10>}, {pipeline_mode = #tpu.pipeline_mode<synchronous>, transform_indices = @transform_1, window_bounds = array<i64: 15, 10>}, {pipeline_mode = #tpu.pipeline_mode<synchronous>, transform_indices = @transform_2, window_bounds = array<i64: 15, 1>}, {pipeline_mode = #tpu.pipeline_mode<synchronous>, transform_indices = @transform_3, window_bounds = array<i64: 28, 15>}, {pipeline_mode = #tpu.pipeline_mode<synchronous>, transform_indices = @transform_4, window_bounds = array<i64: 28, 1>}, {pipeline_mode = #tpu.pipeline_mode<synchronous>, transform_indices = @transform_5, window_bounds = array<i64: 1, 28>}, {pipeline_mode = #tpu.pipeline_mode<synchronous>, transform_indices = @transform_6, window_bounds = array<i64: 1, 1>}, {transform_indices = @transform_7, window_bounds = array<i64: 1, 128>}]} {
    %c0 = arith.constant 0 : index
    %c0_0 = arith.constant 0 : index
    %0 = vector.load %arg1[%c0, %c0_0] : memref<128x10xf32, #tpu.memory_space<vmem>>, vector<128x10xf32>
    %c0_1 = arith.constant 0 : index
    %c0_2 = arith.constant 0 : index
    %1 = vector.load %arg2[%c0_1, %c0_2] : memref<15x10xf32, #tpu.memory_space<vmem>>, vector<15x10xf32>
    %cst = arith.constant dense<0.000000e+00> : vector<15x128xf32>
    %2 = tpu.matmul %1, %0, %cst {dimension_numbers = #tpu.dot_dimension_numbers<[1], [1], [0], [0], [0, 0, 1, 0], [], []>} : vector<15x10xf32>, vector<128x10xf32>, vector<15x128xf32> -> vector<15x128xf32>
    %c0_3 = arith.constant 0 : index
    %c0_4 = arith.constant 0 : index
    %3 = vector.load %arg3[%c0_3, %c0_4] : memref<15x1xf32, #tpu.memory_space<vmem>>, vector<15x1xf32>
    %4 = vector.broadcast %3 : vector<15x1xf32> to vector<15x128xf32>
    %5 = arith.addf %2, %4 : vector<15x128xf32>
    %cst_5 = arith.constant 0.000000e+00 : f32
    %6 = vector.broadcast %cst_5 : f32 to vector<15x128xf32>
    %7 = arith.maximumf %5, %6 : vector<15x128xf32>
    %c0_6 = arith.constant 0 : index
    %c0_7 = arith.constant 0 : index
    %8 = vector.load %arg4[%c0_6, %c0_7] : memref<28x15xf32, #tpu.memory_space<vmem>>, vector<28x15xf32>
    %cst_8 = arith.constant dense<0.000000e+00> : vector<28x128xf32>
    %9 = tpu.matmul %8, %7, %cst_8 {dimension_numbers = #tpu.dot_dimension_numbers<[1], [0], [0], [1], [0, 0, 1, 1], [], []>} : vector<28x15xf32>, vector<15x128xf32>, vector<28x128xf32> -> vector<28x128xf32>
    %c0_9 = arith.constant 0 : index
    %c0_10 = arith.constant 0 : index
    %10 = vector.load %arg5[%c0_9, %c0_10] : memref<28x1xf32, #tpu.memory_space<vmem>>, vector<28x1xf32>
    %11 = vector.broadcast %10 : vector<28x1xf32> to vector<28x128xf32>
    %12 = arith.addf %9, %11 : vector<28x128xf32>
    %cst_11 = arith.constant 0.000000e+00 : f32
    %13 = vector.broadcast %cst_11 : f32 to vector<28x128xf32>
    %14 = arith.maximumf %12, %13 : vector<28x128xf32>
    %c0_12 = arith.constant 0 : index
    %c0_13 = arith.constant 0 : index
    %15 = vector.load %arg6[%c0_12, %c0_13] : memref<1x28xf32, #tpu.memory_space<vmem>>, vector<1x28xf32>
    %cst_14 = arith.constant dense<0.000000e+00> : vector<1x128xf32>
    %16 = tpu.matmul %15, %14, %cst_14 {dimension_numbers = #tpu.dot_dimension_numbers<[1], [0], [0], [1], [0, 0, 1, 1], [], []>} : vector<1x28xf32>, vector<28x128xf32>, vector<1x128xf32> -> vector<1x128xf32>
    %c0_15 = arith.constant 0 : index
    %c0_16 = arith.constant 0 : index
    %17 = vector.load %arg7[%c0_15, %c0_16] : memref<1x1xf32, #tpu.memory_space<vmem>>, vector<1x1xf32>
    %18 = vector.broadcast %17 : vector<1x1xf32> to vector<1x128xf32>
    %19 = arith.addf %16, %18 : vector<1x128xf32>
    %20 = arith.negf %19 : vector<1x128xf32>
    %21 = math.exp %20 : vector<1x128xf32>
    %cst_17 = arith.constant 1.000000e+00 : f32
    %22 = vector.broadcast %cst_17 : f32 to vector<1x128xf32>
    %23 = arith.addf %22, %21 : vector<1x128xf32>
    %24 = arith.divf %22, %23 : vector<1x128xf32>
    %c0_18 = arith.constant 0 : index
    %c0_19 = arith.constant 0 : index
    %25 = vector.load %arg8[%c0_18, %c0_19] : memref<1x128xf32, #tpu.memory_space<vmem>>, vector<1x128xf32>
    tpu.vector_store %arg8[%c0_18, %c0_19], %24 {strides = array<i32>} : memref<1x128xf32, #tpu.memory_space<vmem>>, vector<1x128xf32>,
    return
  }
  func.func @transform_0(%arg0: i32) -> (i32, i32) {
    %c0_i32 = arith.constant 0 : i32
    %c0_i32_0 = arith.constant 0 : i32
    return %arg0, %c0_i32 : i32, i32
  }
  func.func @transform_1(%arg0: i32) -> (i32, i32) {
    %c0_i32 = arith.constant 0 : i32
    %c0_i32_0 = arith.constant 0 : i32
    %c0_i32_1 = arith.constant 0 : i32
    return %c0_i32, %c0_i32_0 : i32, i32
  }
  func.func @transform_2(%arg0: i32) -> (i32, i32) {
    %c0_i32 = arith.constant 0 : i32
    %c0_i32_0 = arith.constant 0 : i32
    %c0_i32_1 = arith.constant 0 : i32
    return %c0_i32, %c0_i32_0 : i32, i32
  }
  func.func @transform_3(%arg0: i32) -> (i32, i32) {
    %c0_i32 = arith.constant 0 : i32
    %c0_i32_0 = arith.constant 0 : i32
    %c0_i32_1 = arith.constant 0 : i32
    return %c0_i32, %c0_i32_0 : i32, i32
  }
  func.func @transform_4(%arg0: i32) -> (i32, i32) {
    %c0_i32 = arith.constant 0 : i32
    %c0_i32_0 = arith.constant 0 : i32
    %c0_i32_1 = arith.constant 0 : i32
    return %c0_i32, %c0_i32_0 : i32, i32
  }
  func.func @transform_5(%arg0: i32) -> (i32, i32) {
    %c0_i32 = arith.constant 0 : i32
    %c0_i32_0 = arith.constant 0 : i32
    %c0_i32_1 = arith.constant 0 : i32
    return %c0_i32, %c0_i32_0 : i32, i32
  }
  func.func @transform_6(%arg0: i32) -> (i32, i32) {
    %c0_i32 = arith.constant 0 : i32
    %c0_i32_0 = arith.constant 0 : i32
    %c0_i32_1 = arith.constant 0 : i32
    return %c0_i32, %c0_i32_0 : i32, i32
  }
  func.func @transform_7(%arg0: i32) -> (i32, i32) {
    %c0_i32 = arith.constant 0 : i32
    %c0_i32_0 = arith.constant 0 : i32
    return %c0_i32, %arg0 : i32, i32
  }
}

</mosaic_0001>

<llo_original>
// kernel: svm_forward.1
$region0: #{svm_forward.1}
  #allocation0 [shape = 'u32[]', space=smem, size = 0x4, offset = 0x4, fixed_abs, tag = 'smem constant byte address 0x4 - core index']
  #allocation1 [shape = 'u32[72,128]{1,0:T(1,128)}', space=vmem, size = 0x9000, scoped, tag = 'internal scratch']
  #allocation2 [shape = 'f32[1,1]{1,0:T(1,128)S(1)}', space=vmem, size = 0x200, scoped, tag = 'scoped memory for svm_forward.1']
  %s0 = inlined_call_operand.vmem [shape: f32[8,10], index: 0, kind: input, shape index: {}]
  %s1 = inlined_call_operand.vmem [shape: f32[15,10], index: 1, kind: input, shape index: {}]
  %s2 = inlined_call_operand.vmem [shape: f32[15,1], index: 2, kind: input, shape index: {}]
  %s3 = inlined_call_operand.vmem [shape: f32[28,15], index: 3, kind: input, shape index: {}]
  %s4 = inlined_call_operand.vmem [shape: f32[28,1], index: 4, kind: input, shape index: {}]
  %s5 = inlined_call_operand.vmem [shape: f32[1,28], index: 5, kind: input, shape index: {}]
  %s6 = inlined_call_operand.<no memory space> [shape: f32[1,1], index: 6, kind: input, shape index: {}]
  %s7 = inlined_call_operand.hbm [shape: f32[1,8], index: 7, kind: output, shape index: {}]
  %s8 = sld [smem:[#allocation0]]
  $region38: #{svm_forward.1} parent=0
    _
  %s10 = ssub.s32 1, %s8
  %s11 = scalar_select 0, %s10, %s8
  %v12 = vstv %s6
  %13 = vst [vmem:[#allocation2] sm:$0x1] %v12
  $region1: #{svm_forward.1} parent=0
    #allocation3 [shape = 'u8[512]{0}', space=vmem, size = 0x400, scoped, tag = 'output window, operand 0, single buffered']
    #allocation4 [shape = 's32[1]{0}', space=sflag, size = 0x4, scoped, tag = 'scoped memory for svm_forward.1']
    %14 = vsyncpa [#allocation4], 0
    // Predicated region
    $region2: #{svm_forward.1} parent=1 // pred_check
      _
    $region3: #{svm_forward.1} parent=1 // pred_check_branch
      %16 = sbr.rel (0) target = $region5
    $region4: #{svm_forward.1} parent=1 // pred_region
      _
    $region5: #{svm_forward.1} parent=1 // pred_fallthru
      _
    // Predicated region
    $region6: #{svm_forward.1} parent=1 // pred_check
      _
    $region7: #{svm_forward.1} parent=1 // pred_check_branch
      %18 = sbr.rel (0) target = $region9
    $region8: #{svm_forward.1} parent=1 // pred_region
      _
    $region9: #{svm_forward.1} parent=1 // pred_fallthru
      _
    // Predicated region
    $region10: #{svm_forward.1} parent=1 // pred_check
      _
    $region11: #{svm_forward.1} parent=1 // pred_check_branch
      %20 = sbr.rel (0) target = $region13
    $region12: #{svm_forward.1} parent=1 // pred_region
      _
    $region13: #{svm_forward.1} parent=1 // pred_fallthru
      _
    // Predicated region
    $region14: #{svm_forward.1} parent=1 // pred_check
      _
    $region15: #{svm_forward.1} parent=1 // pred_check_branch
      %22 = sbr.rel (0) target = $region17
    $region16: #{svm_forward.1} parent=1 // pred_region
      _
    $region17: #{svm_forward.1} parent=1 // pred_fallthru
      _
    // Predicated region
    $region18: #{svm_forward.1} parent=1 // pred_check
      _
    $region19: #{svm_forward.1} parent=1 // pred_check_branch
      %24 = sbr.rel (0) target = $region21
    $region20: #{svm_forward.1} parent=1 // pred_region
      _
    $region21: #{svm_forward.1} parent=1 // pred_fallthru
      _
    // Predicated region
    $region22: #{svm_forward.1} parent=1 // pred_check
      _
    $region23: #{svm_forward.1} parent=1 // pred_check_branch
      %26 = sbr.rel (0) target = $region25
    $region24: #{svm_forward.1} parent=1 // pred_region
      _
    $region25: #{svm_forward.1} parent=1 // pred_fallthru
      _
    // Predicated region
    $region26: #{svm_forward.1} parent=1 // pred_check
      _
    $region27: #{svm_forward.1} parent=1 // pred_check_branch
      %28 = sbr.rel (0) target = $region29
    $region28: #{svm_forward.1} parent=1 // pred_region
      _
    $region29: #{svm_forward.1} parent=1 // pred_fallthru
      _
    %v29 = vld [vmem:[%s0] sm:$0xff]
    %v30 = vld [vmem:[%s0 + $0x8] sm:$0xff]
    %v31 = vld [vmem:[%s0 + $0x10] sm:$0xff]
    %v32 = vld [vmem:[%s0 + $0x18] sm:$0xff]
    %v33 = vld [vmem:[%s0 + $0x20] sm:$0xff]
    %v34 = vld [vmem:[%s0 + $0x28] sm:$0xff]
    %v35 = vld [vmem:[%s0 + $0x30] sm:$0xff]
    %v36 = vld [vmem:[%s0 + $0x38] sm:$0xff]
    %v37 = vld [vmem:[%s0 + $0x40] sm:$0xff]
    %v38 = vld [vmem:[%s0 + $0x48] sm:$0xff]
    %v39 = vld [vmem:[%s0 + $0x50] sm:$0xff]
    %v40 = vld [vmem:[%s0 + $0x58] sm:$0xff]
    %v41 = vld [vmem:[%s0 + $0x60] sm:$0xff]
    %v42 = vld [vmem:[%s0 + $0x68] sm:$0xff]
    %v43 = vld [vmem:[%s0 + $0x70] sm:$0xff]
    %v44 = vld [vmem:[%s0 + $0x78] sm:$0xff]
    %v45 = vld [vmem:[%s1] sm:$0xff]
    %v46 = vld [vmem:[%s1 + $0x8] sm:$0x7f]
    %v47 = vld [vmem:[%s2] sm:$0xff]
    %v48 = vld [vmem:[%s2 + $0x8] sm:$0x7f]
    %50 = vset.pattern.permute.xlu0 0
    %51 = vperm.xlu0 %50, %v47
    %v52 = vpop.permute.xlu0 %51
    %55 = vset.pattern.permute.xlu0 0
    %56 = vperm.xlu0 %55, %v48
    %v57 = vpop.permute.xlu0 %56
    %vm59 = vcmask 80896
    %v61 = vsel %vm59, %v45, 0
    %v64 = vsel %vm59, %v46, 0
    %v67 = vsel %vm59, %v29, 0
    %v70 = vsel %vm59, %v30, 0
    %v73 = vsel %vm59, %v31, 0
    %v76 = vsel %vm59, %v32, 0
    %v79 = vsel %vm59, %v33, 0
    %v82 = vsel %vm59, %v34, 0
    %v85 = vsel %vm59, %v35, 0
    %v88 = vsel %vm59, %v36, 0
    %v91 = vsel %vm59, %v37, 0
    %v94 = vsel %vm59, %v38, 0
    %v97 = vsel %vm59, %v39, 0
    %v100 = vsel %vm59, %v40, 0
    %v103 = vsel %vm59, %v41, 0
    %v106 = vsel %vm59, %v42, 0
    %v109 = vsel %vm59, %v43, 0
    %v112 = vsel %vm59, %v44, 0
    %114 = vmatpush.xpose.msra.mxu0 %v112
    %115 = vmatpush.xpose.msra.mxu0 %v109
    %116 = vmatpush.xpose.msra.mxu0 %v106
    %117 = vmatpush.xpose.msra.mxu0 %v103
    %118 = vmatpush.xpose.msra.mxu0 %v100
    %119 = vmatpush.xpose.msra.mxu0 %v97
    %120 = vmatpush.xpose.msra.mxu0 %v94
    %121 = vmatpush.xpose.msra.mxu0 %v91
    %122 = vmatpush.xpose.msra.mxu0 %v88
    %123 = vmatpush.xpose.msra.mxu0 %v85
    %124 = vmatpush.xpose.msra.mxu0 %v82
    %125 = vmatpush.xpose.msra.mxu0 %v79
    %126 = vmatpush.xpose.msra.mxu0 %v76
    %127 = vmatpush.xpose.msra.mxu0 %v73
    %128 = vmatpush.xpose.msra.mxu0 %v70
    %129 = vmatpush.xpose.msra.mxu0 %v67
    %130 = vmatmul.f32.gmra.mxu0 %v61
    %v131 = vpop.f32.mrf.mxu0
    %v132 = vadd.f32 %v52, %v131
    %133 = vmatmul.f32.gmra.mxu0 %v64
    %v134 = vpop.f32.mrf.mxu0
    %v135 = vadd.f32 %v57, %v134
    %136 = vdwg.mxu0
    %v137 = vmax.f32 %v132, 0.0
    %v138 = vmax.f32 %v135, 0.0
    %v139 = vld [vmem:[%s3] sm:$0xff]
    %v140 = vld [vmem:[%s3 + $0x8] sm:$0xff]
    %v141 = vld [vmem:[%s3 + $0x10] sm:$0xff]
    %v142 = vld [vmem:[%s3 + $0x18] sm:$0xf]
    %v143 = vld [vmem:[%s4] sm:$0xff]
    %v144 = vld [vmem:[%s4 + $0x8] sm:$0xff]
    %v145 = vld [vmem:[%s4 + $0x10] sm:$0xff]
    %v146 = vld [vmem:[%s4 + $0x18] sm:$0xf]
    %148 = vset.pattern.permute.xlu0 0
    %149 = vperm.xlu0 %148, %v143
    %v150 = vpop.permute.xlu0 %149
    %153 = vset.pattern.permute.xlu0 0
    %154 = vperm.xlu0 %153, %v144
    %v155 = vpop.permute.xlu0 %154
    %158 = vset.pattern.permute.xlu0 0
    %159 = vperm.xlu0 %158, %v145
    %v160 = vpop.permute.xlu0 %159
    %163 = vset.pattern.permute.xlu0 0
    %164 = vperm.xlu0 %163, %v146
    %v165 = vpop.permute.xlu0 %164
    %vm167 = vcmask 121856
    %v169 = vsel %vm167, %v139, 0
    %v172 = vsel %vm167, %v140, 0
    %v175 = vsel %vm167, %v141, 0
    %v178 = vsel %vm167, %v142, 0
    %vm180 = vcmask 1046528
    %v182 = vsel %vm180, %v138, 0
    %184 = vmatpush.msra.mxu0 0.0
    %185 = vmatpush.msra.mxu0 0.0
    %186 = vmatpush.msra.mxu0 0.0
    %187 = vmatpush.msra.mxu0 0.0
    %188 = vmatpush.msra.mxu0 0.0
    %189 = vmatpush.msra.mxu0 0.0
    %190 = vmatpush.msra.mxu0 0.0
    %191 = vmatpush.msra.mxu0 0.0
    %192 = vmatpush.msra.mxu0 0.0
    %193 = vmatpush.msra.mxu0 0.0
    %194 = vmatpush.msra.mxu0 0.0
    %195 = vmatpush.msra.mxu0 0.0
    %196 = vmatpush.msra.mxu0 0.0
    %197 = vmatpush.msra.mxu0 0.0
    %198 = vmatpush.msra.mxu0 %v182
    %199 = vmatpush.msra.mxu0 %v137
    %200 = vmatmul.f32.gmra.mxu0 %v169
    %v201 = vpop.f32.mrf.mxu0
    %v202 = vadd.f32 %v150, %v201
    %203 = vmatmul.f32.gmra.mxu0 %v172
    %v204 = vpop.f32.mrf.mxu0
    %v205 = vadd.f32 %v155, %v204
    %206 = vmatmul.f32.gmra.mxu0 %v175
    %v207 = vpop.f32.mrf.mxu0
    %v208 = vadd.f32 %v160, %v207
    %209 = vmatmul.f32.gmra.mxu0 %v178
    %v210 = vpop.f32.mrf.mxu0
    %v211 = vadd.f32 %v165, %v210
    %212 = vdwg.mxu0
    %v213 = vmax.f32 %v202, 0.0
    %v214 = vmax.f32 %v205, 0.0
    %v215 = vmax.f32 %v208, 0.0
    %v216 = vmax.f32 %v211, 0.0
    %v217 = vld [vmem:[%s5] sm:$0x1]
    %v218 = vld [vmem:[#allocation2] sm:$0x1]
    %220 = vset.pattern.permute.xlu0 0
    %221 = vperm.xlu0 %220, %v218
    %v222 = vpop.permute.xlu0 %221
    %v224 = vperm.slane %v222, 0
    %vm225 = vcmask 228352
    %v227 = vsel %vm225, %v217, 0
    %vm229 = vcmask 1043456
    %v231 = vsel %vm229, %v216, 0
    %233 = vmatpush.msra.mxu0 0.0
    %234 = vmatpush.msra.mxu0 0.0
    %235 = vmatpush.msra.mxu0 0.0
    %236 = vmatpush.msra.mxu0 0.0
    %237 = vmatpush.msra.mxu0 0.0
    %238 = vmatpush.msra.mxu0 0.0
    %239 = vmatpush.msra.mxu0 0.0
    %240 = vmatpush.msra.mxu0 0.0
    %241 = vmatpush.msra.mxu0 0.0
    %242 = vmatpush.msra.mxu0 0.0
    %243 = vmatpush.msra.mxu0 0.0
    %244 = vmatpush.msra.mxu0 0.0
    %245 = vmatpush.msra.mxu0 %v231
    %246 = vmatpush.msra.mxu0 %v215
    %247 = vmatpush.msra.mxu0 %v214
    %248 = vmatpush.msra.mxu0 %v213
    %249 = vmatmul.f32.gmra.mxu0 %v227
    %v250 = vpop.f32.mrf.mxu0
    %v251 = vadd.f32 %v224, %v250
    %252 = vdwg.mxu0
    %v253 = vxor.u32 %v251, 2147483648
    %v254 = vmul.f32 %v253, 1.442695
    %v255 = vpow.pop %v254
    %v256 = vadd.f32 %v255, 1.0
    %v257 = vrcp.pop %v256
    %v258 = vmul.f32 %v256, %v257
    %v259 = vsub.f32 1.0, %v258
    %v260 = vmul.f32 %v257, %v259
    %v261 = vadd.f32 %v257, %v260
    %vm262 = vweird.f32 %v256
    %vm263 = vweird.f32 %v257
    %vm264 = vmor %vm262, %vm263
    %v265 = vsel %vm264, %v257, %v261
    %v266 = vand.u32 2147483647, %v256
    %vm267 = vcmp.eq.f32.partialorder %v266, 8.507059e+37
    %v268 = vand.u32 %v256, 2147483648
    %v269 = vor.u32 1.1754944e-38, %v268
    %v270 = vsel %vm267, %v269, %v265
    %v271 = vmul.f32 1.0, %v270
    %272 = vst [vmem:[#allocation3] sm:$0x1] %v271
    // Predicated region
    $region30: #{svm_forward.1} parent=1 // pred_check
      _
    $region31: #{svm_forward.1} parent=1 // pred_check_branch
      %274 = sbr.rel (0) target = $region33
    $region32: #{svm_forward.1} parent=1 // pred_region
      %276 = vsyncadd [#allocation4], 0
      %s278 = sshll.u32 [#allocation3], 4
      %s279 = int_to_ptr.vmem [resolvable:$true] %s278
      %s280 = sshll.u32 %s7, 4
      %s281 = int_to_ptr.hbm [resolvable:$true] %s280
      %283 = dma.vmem_to_hbm [thread:$0]  %s279, 16, %s281, [#allocation4]
    $region33: #{svm_forward.1} parent=1 // pred_fallthru
      _
    // Predicated region
    $region34: #{svm_forward.1} parent=1 // pred_check
      _
    $region35: #{svm_forward.1} parent=1 // pred_check_branch
      %285 = sbr.rel (0) target = $region37
    $region36: #{svm_forward.1} parent=1 // pred_region
      %287 = dma.done [#allocation4], 16
    $region37: #{svm_forward.1} parent=1 // pred_fallthru
      _
    %288 = vsyncpa [#allocation4], 1

</llo_original>
